<compile_context>
chip_gen: v7x
topology: tpu7x:2x2x1
jax: 0.10.0
libtpu: 0.0.40
codegen_flags: <defaults>
</compile_context>

<pallas_src>
import functools

import jax
import jax.numpy as jnp
from jax.experimental import pallas as pl
from jax.experimental.pallas import tpu as pltpu


def _round_up(x, m):
    return (x + m - 1) // m * m


def _fused_mlp_kernel(x_ref, w_ref, b_ref, o_ref, *, num_layers):
    # x_ref: [tile_m, D_pad] f32   (zero-padded activations)
    # w_ref: [L, D_pad, D_pad] bf16 (layer weights, (in, out) layout, zero-padded)
    # b_ref: [L, 1, D_pad] f32      (layer biases, zero-padded)
    # o_ref: [tile_m, D_pad] f32
    h = x_ref[...].astype(jnp.float32)
    # Statically unrolled layer loop: tiny compile-time trip count, all shapes
    # identical (D_pad x D_pad); the activation stays in vregs between layers.
    for l in range(num_layers):
        # bf16 x bf16 on the MXU, f32 accumulation.
        acc = jnp.dot(h.astype(jnp.bfloat16), w_ref[l],
                      preferred_element_type=jnp.float32)
        acc = acc + b_ref[l]
        if l != num_layers - 1:          # last layer: no tanh (matches PyTorch spec)
            acc = jnp.tanh(acc)          # EUP op; padded lanes: tanh(0) = 0
        h = acc
    o_ref[...] = h.astype(o_ref.dtype)


def pack_params(params, d_pad, weight_dtype=jnp.bfloat16):
    """One-time packing (hoisted out of the forward path).

    Transposes PyTorch-style (out_features, in_features) weights to (in, out),
    casts them to `weight_dtype` (bf16 for the MXU) and zero-pads everything
    to D_pad so every matmul/store is lane-dense.  Biases stay f32.
    """
    L = len(params)
    w_stack = jnp.zeros((L, d_pad, d_pad), weight_dtype)
    b_stack = jnp.zeros((L, 1, d_pad), jnp.float32)
    for l, (w, b) in enumerate(params):
        fan_out, fan_in = w.shape
        w_stack = w_stack.at[l, :fan_in, :fan_out].set(
            jnp.transpose(w).astype(weight_dtype))
        b_stack = b_stack.at[l, 0, :fan_out].set(b.astype(jnp.float32))
    return w_stack, b_stack


def fused_latent_mapping(x, w_stack, b_stack, *, output_dim, tile_m=256):
    """Forward pass of LatentMappingLayer (eval mode) as one fused Pallas call."""
    M, K = x.shape
    L, d_pad, _ = w_stack.shape
    kernel = functools.partial(_fused_mlp_kernel, num_layers=L)

    if M <= tile_m:
        # Single-shot, grid-less call: whole operands live in VMEM once
        # (no pipelining => no double-buffering of the weight slab).
        m_pad = _round_up(max(M, 8), 8)   # f32 activations: 8-row sublane align
        x_p = jnp.pad(x.astype(jnp.float32), ((0, m_pad - M), (0, d_pad - K)))
        out_p = pl.pallas_call(
            kernel,
            out_shape=jax.ShapeDtypeStruct((m_pad, d_pad), jnp.float32),
        )(x_p, w_stack, b_stack)
    else:
        # Batch-tiled path: leading "parallel" axis lets megacore shard M
        # across TensorCores; weights/bias stay resident (constant index_map).
        m_pad = _round_up(M, tile_m)
        x_p = jnp.pad(x.astype(jnp.float32), ((0, m_pad - M), (0, d_pad - K)))
        out_p = pl.pallas_call(
            kernel,
            out_shape=jax.ShapeDtypeStruct((m_pad, d_pad), jnp.float32),
            grid=(m_pad // tile_m,),
            in_specs=[
                pl.BlockSpec((tile_m, d_pad), lambda i: (i, 0)),
                pl.BlockSpec((L, d_pad, d_pad), lambda i: (0, 0, 0)),
                pl.BlockSpec((L, 1, d_pad), lambda i: (0, 0, 0)),
            ],
            out_specs=pl.BlockSpec((tile_m, d_pad), lambda i: (i, 0)),
            compiler_params=pltpu.CompilerParams(
                dimension_semantics=("parallel",)),
        )(x_p, w_stack, b_stack)

    # Static slice of the real output; fuses with the call under jax.jit.
    return out_p[:M, :output_dim]


def init_params(key, input_dim, hidden_dim, output_dim, num_layers):
    """Deterministic PyTorch-style init: W ~ U(-1/sqrt(fan_in), 1/sqrt(fan_in))."""
    dims_in = [input_dim] + [hidden_dim] * (num_layers - 1)
    dims_out = [hidden_dim] * (num_layers - 1) + [output_dim]
    params = []
    for fan_in, fan_out in zip(dims_in, dims_out):
        kw, kb, key = jax.random.split(key, 3)
        bound = 1.0 / (fan_in ** 0.5)
        # stored PyTorch-style: (out_features, in_features)
        w = jax.random.uniform(kw, (fan_out, fan_in), jnp.float32, -bound, bound)
        b = jax.random.uniform(kb, (fan_out,), jnp.float32, -bound, bound)
        params.append((w, b))
    return params


def reference_forward(x, params, weight_dtype=jnp.float32):
    """Pure-JAX reference. weight_dtype=bf16 mirrors the kernel's casts exactly."""
    num_layers = len(params)
    h = x.astype(jnp.float32)
    for i, (w, b) in enumerate(params):
        h = jnp.dot(h.astype(weight_dtype),
                    jnp.transpose(w).astype(weight_dtype),
                    preferred_element_type=jnp.float32) + b
        if i != num_layers - 1:
            h = jnp.tanh(h)
    return h


if __name__ == "__main__":
    input_dim, hidden_dim, output_dim, num_layers = 32, 32, 16, 6
    batch = 8

    key = jax.random.PRNGKey(0)
    kx, kp = jax.random.split(key)
    x = jax.random.normal(kx, (batch, input_dim), dtype=jnp.float32)
    params = init_params(kp, input_dim, hidden_dim, output_dim, num_layers)

    # One-time parameter packing (hoisted transposes + bf16 cast + lane padding).
    d_pad = _round_up(max(input_dim, hidden_dim, output_dim), 128)
    w_stack, b_stack = pack_params(params, d_pad)

    fused_forward = jax.jit(fused_latent_mapping,
                            static_argnames=("output_dim", "tile_m"))
    out = fused_forward(x, w_stack, b_stack, output_dim=output_dim)
    out = jax.block_until_ready(out)

    assert out.shape == (batch, output_dim), out.shape

    # Mechanics check: reference with the identical bf16 weight/activation casts.
    ref_bf16 = reference_forward(x, params, weight_dtype=jnp.bfloat16)
    assert jnp.allclose(out, ref_bf16, atol=1e-4, rtol=1e-4), \
        "mismatch vs bf16-matched reference"

    # Semantic check vs the exact f32 PyTorch math (bf16 quantization noise only).
    ref_f32 = reference_forward(x, params)
    assert jnp.allclose(out, ref_f32, atol=3e-2, rtol=3e-2), \
        "mismatch vs f32 reference"

    print("KERNEL_OK")
</pallas_src>

<mosaic_0001>
module attributes {stable_mosaic.version = 11 : i64} {
  func.func @_fused_mlp_kernel(%arg0: memref<8x128xf32, #tpu.memory_space<vmem>>, %arg1: memref<6x128x128xbf16, #tpu.memory_space<vmem>>, %arg2: memref<6x1x128xf32, #tpu.memory_space<vmem>>, %arg3: memref<8x128xf32, #tpu.memory_space<vmem>>) attributes {dimension_semantics = [], scalar_prefetch = 0 : i64, scratch_operands = 0 : i64, tpu.core_type = #tpu.core_type<tc>} {
    %c0 = arith.constant 0 : index
    %c0_0 = arith.constant 0 : index
    %0 = vector.load %arg0[%c0, %c0_0] : memref<8x128xf32, #tpu.memory_space<vmem>>, vector<8x128xf32>
    %1 = arith.truncf %0 : vector<8x128xf32> to vector<8x128xbf16>
    %c0_1 = arith.constant 0 : index
    %c0_2 = arith.constant 0 : index
    %c0_3 = arith.constant 0 : index
    %2 = vector.load %arg1[%c0_1, %c0_2, %c0_3] : memref<6x128x128xbf16, #tpu.memory_space<vmem>>, vector<1x128x128xbf16>
    %3 = vector.shape_cast %2 : vector<1x128x128xbf16> to vector<128x128xbf16>
    %cst = arith.constant dense<0.000000e+00> : vector<8x128xf32>
    %4 = tpu.matmul %1, %3, %cst {dimension_numbers = #tpu.dot_dimension_numbers<[1], [0], [0], [1], [0, 0, 1, 1], [], []>} : vector<8x128xbf16>, vector<128x128xbf16>, vector<8x128xf32> -> vector<8x128xf32>
    %c0_4 = arith.constant 0 : index
    %c0_5 = arith.constant 0 : index
    %c0_6 = arith.constant 0 : index
    %5 = vector.load %arg2[%c0_4, %c0_5, %c0_6] : memref<6x1x128xf32, #tpu.memory_space<vmem>>, vector<1x1x128xf32>
    %6 = vector.shape_cast %5 : vector<1x1x128xf32> to vector<1x128xf32>
    %7 = vector.broadcast %6 : vector<1x128xf32> to vector<8x128xf32>
    %8 = arith.addf %4, %7 : vector<8x128xf32>
    %9 = math.tanh %8 : vector<8x128xf32>
    %10 = arith.truncf %9 : vector<8x128xf32> to vector<8x128xbf16>
    %c1 = arith.constant 1 : index
    %c0_7 = arith.constant 0 : index
    %c0_8 = arith.constant 0 : index
    %11 = vector.load %arg1[%c1, %c0_7, %c0_8] : memref<6x128x128xbf16, #tpu.memory_space<vmem>>, vector<1x128x128xbf16>
    %12 = vector.shape_cast %11 : vector<1x128x128xbf16> to vector<128x128xbf16>
    %cst_9 = arith.constant dense<0.000000e+00> : vector<8x128xf32>
    %13 = tpu.matmul %10, %12, %cst_9 {dimension_numbers = #tpu.dot_dimension_numbers<[1], [0], [0], [1], [0, 0, 1, 1], [], []>} : vector<8x128xbf16>, vector<128x128xbf16>, vector<8x128xf32> -> vector<8x128xf32>
    %c1_10 = arith.constant 1 : index
    %c0_11 = arith.constant 0 : index
    %c0_12 = arith.constant 0 : index
    %14 = vector.load %arg2[%c1_10, %c0_11, %c0_12] : memref<6x1x128xf32, #tpu.memory_space<vmem>>, vector<1x1x128xf32>
    %15 = vector.shape_cast %14 : vector<1x1x128xf32> to vector<1x128xf32>
    %16 = vector.broadcast %15 : vector<1x128xf32> to vector<8x128xf32>
    %17 = arith.addf %13, %16 : vector<8x128xf32>
    %18 = math.tanh %17 : vector<8x128xf32>
    %19 = arith.truncf %18 : vector<8x128xf32> to vector<8x128xbf16>
    %c2 = arith.constant 2 : index
    %c0_13 = arith.constant 0 : index
    %c0_14 = arith.constant 0 : index
    %20 = vector.load %arg1[%c2, %c0_13, %c0_14] : memref<6x128x128xbf16, #tpu.memory_space<vmem>>, vector<1x128x128xbf16>
    %21 = vector.shape_cast %20 : vector<1x128x128xbf16> to vector<128x128xbf16>
    %cst_15 = arith.constant dense<0.000000e+00> : vector<8x128xf32>
    %22 = tpu.matmul %19, %21, %cst_15 {dimension_numbers = #tpu.dot_dimension_numbers<[1], [0], [0], [1], [0, 0, 1, 1], [], []>} : vector<8x128xbf16>, vector<128x128xbf16>, vector<8x128xf32> -> vector<8x128xf32>
    %c2_16 = arith.constant 2 : index
    %c0_17 = arith.constant 0 : index
    %c0_18 = arith.constant 0 : index
    %23 = vector.load %arg2[%c2_16, %c0_17, %c0_18] : memref<6x1x128xf32, #tpu.memory_space<vmem>>, vector<1x1x128xf32>
    %24 = vector.shape_cast %23 : vector<1x1x128xf32> to vector<1x128xf32>
    %25 = vector.broadcast %24 : vector<1x128xf32> to vector<8x128xf32>
    %26 = arith.addf %22, %25 : vector<8x128xf32>
    %27 = math.tanh %26 : vector<8x128xf32>
    %28 = arith.truncf %27 : vector<8x128xf32> to vector<8x128xbf16>
    %c3 = arith.constant 3 : index
    %c0_19 = arith.constant 0 : index
    %c0_20 = arith.constant 0 : index
    %29 = vector.load %arg1[%c3, %c0_19, %c0_20] : memref<6x128x128xbf16, #tpu.memory_space<vmem>>, vector<1x128x128xbf16>
    %30 = vector.shape_cast %29 : vector<1x128x128xbf16> to vector<128x128xbf16>
    %cst_21 = arith.constant dense<0.000000e+00> : vector<8x128xf32>
    %31 = tpu.matmul %28, %30, %cst_21 {dimension_numbers = #tpu.dot_dimension_numbers<[1], [0], [0], [1], [0, 0, 1, 1], [], []>} : vector<8x128xbf16>, vector<128x128xbf16>, vector<8x128xf32> -> vector<8x128xf32>
    %c3_22 = arith.constant 3 : index
    %c0_23 = arith.constant 0 : index
    %c0_24 = arith.constant 0 : index
    %32 = vector.load %arg2[%c3_22, %c0_23, %c0_24] : memref<6x1x128xf32, #tpu.memory_space<vmem>>, vector<1x1x128xf32>
    %33 = vector.shape_cast %32 : vector<1x1x128xf32> to vector<1x128xf32>
    %34 = vector.broadcast %33 : vector<1x128xf32> to vector<8x128xf32>
    %35 = arith.addf %31, %34 : vector<8x128xf32>
    %36 = math.tanh %35 : vector<8x128xf32>
    %37 = arith.truncf %36 : vector<8x128xf32> to vector<8x128xbf16>
    %c4 = arith.constant 4 : index
    %c0_25 = arith.constant 0 : index
    %c0_26 = arith.constant 0 : index
    %38 = vector.load %arg1[%c4, %c0_25, %c0_26] : memref<6x128x128xbf16, #tpu.memory_space<vmem>>, vector<1x128x128xbf16>
    %39 = vector.shape_cast %38 : vector<1x128x128xbf16> to vector<128x128xbf16>
    %cst_27 = arith.constant dense<0.000000e+00> : vector<8x128xf32>
    %40 = tpu.matmul %37, %39, %cst_27 {dimension_numbers = #tpu.dot_dimension_numbers<[1], [0], [0], [1], [0, 0, 1, 1], [], []>} : vector<8x128xbf16>, vector<128x128xbf16>, vector<8x128xf32> -> vector<8x128xf32>
    %c4_28 = arith.constant 4 : index
    %c0_29 = arith.constant 0 : index
    %c0_30 = arith.constant 0 : index
    %41 = vector.load %arg2[%c4_28, %c0_29, %c0_30] : memref<6x1x128xf32, #tpu.memory_space<vmem>>, vector<1x1x128xf32>
    %42 = vector.shape_cast %41 : vector<1x1x128xf32> to vector<1x128xf32>
    %43 = vector.broadcast %42 : vector<1x128xf32> to vector<8x128xf32>
    %44 = arith.addf %40, %43 : vector<8x128xf32>
    %45 = math.tanh %44 : vector<8x128xf32>
    %46 = arith.truncf %45 : vector<8x128xf32> to vector<8x128xbf16>
    %c5 = arith.constant 5 : index
    %c0_31 = arith.constant 0 : index
    %c0_32 = arith.constant 0 : index
    %47 = vector.load %arg1[%c5, %c0_31, %c0_32] : memref<6x128x128xbf16, #tpu.memory_space<vmem>>, vector<1x128x128xbf16>
    %48 = vector.shape_cast %47 : vector<1x128x128xbf16> to vector<128x128xbf16>
    %cst_33 = arith.constant dense<0.000000e+00> : vector<8x128xf32>
    %49 = tpu.matmul %46, %48, %cst_33 {dimension_numbers = #tpu.dot_dimension_numbers<[1], [0], [0], [1], [0, 0, 1, 1], [], []>} : vector<8x128xbf16>, vector<128x128xbf16>, vector<8x128xf32> -> vector<8x128xf32>
    %c5_34 = arith.constant 5 : index
    %c0_35 = arith.constant 0 : index
    %c0_36 = arith.constant 0 : index
    %50 = vector.load %arg2[%c5_34, %c0_35, %c0_36] : memref<6x1x128xf32, #tpu.memory_space<vmem>>, vector<1x1x128xf32>
    %51 = vector.shape_cast %50 : vector<1x1x128xf32> to vector<1x128xf32>
    %52 = vector.broadcast %51 : vector<1x128xf32> to vector<8x128xf32>
    %53 = arith.addf %49, %52 : vector<8x128xf32>
    %c0_37 = arith.constant 0 : index
    %c0_38 = arith.constant 0 : index
    %54 = vector.load %arg3[%c0_37, %c0_38] : memref<8x128xf32, #tpu.memory_space<vmem>>, vector<8x128xf32>
    tpu.vector_store %arg3[%c0_37, %c0_38], %53 {strides = array<i32>} : memref<8x128xf32, #tpu.memory_space<vmem>>, vector<8x128xf32>,
    return
  }
}

</mosaic_0001>

<llo_original>
// kernel: fused_latent_mapping.1
$region0: #{fused_latent_mapping.1}
  #allocation0 [shape = 'u32[]', space=smem, size = 0x4, offset = 0x4, fixed_abs, tag = 'smem constant byte address 0x4 - core index']
  #allocation1 [shape = 'u32[144,128]{1,0:T(1,128)}', space=vmem, size = 0x12000, scoped, tag = 'internal scratch']
  %s0 = inlined_call_operand.vmem [shape: f32[8,128], index: 0, kind: input, shape index: {}]
  %s1 = inlined_call_operand.hbm [shape: bf16[6,128,128], index: 1, kind: input, shape index: {}]
  %s2 = inlined_call_operand.vmem [shape: f32[6,1,128], index: 2, kind: input, shape index: {}]
  %s3 = inlined_call_operand.hbm [shape: f32[8,128], index: 3, kind: output, shape index: {}]
  %s4 = sld [smem:[#allocation0]]
  $region26: #{fused_latent_mapping.1} parent=0
    _
  %s6 = ssub.s32 1, %s4
  %s7 = scalar_select 0, %s6, %s4
  $region1: #{fused_latent_mapping.1} parent=0
    #allocation2 [shape = 'u8[196608]{0}', space=vmem, size = 0x30000, scoped, tag = 'input window, operand 1, single buffered']
    #allocation3 [shape = 's32[1]{0}', space=sflag, size = 0x4, scoped, tag = 'scoped memory for fused_latent_mapping.1']
    #allocation4 [shape = 's32[1]{0}', space=sflag, size = 0x4, scoped, tag = 'scoped memory for fused_latent_mapping.1']
    #allocation5 [shape = 'u8[4096]{0}', space=vmem, size = 0x1000, scoped, tag = 'output window, operand 0, single buffered']
    %8 = vsyncpa [#allocation3], 0
    %9 = vsyncpa [#allocation4], 0
    // Predicated region
    $region2: #{fused_latent_mapping.1} parent=1 // pred_check
      _
    $region3: #{fused_latent_mapping.1} parent=1 // pred_check_branch
      %11 = sbr.rel (0) target = $region5
    $region4: #{fused_latent_mapping.1} parent=1 // pred_region
      _
    $region5: #{fused_latent_mapping.1} parent=1 // pred_fallthru
      _
    // Predicated region
    $region6: #{fused_latent_mapping.1} parent=1 // pred_check
      _
    $region7: #{fused_latent_mapping.1} parent=1 // pred_check_branch
      %13 = sbr.rel (0) target = $region9
    $region8: #{fused_latent_mapping.1} parent=1 // pred_region
      %s15 = ssub.s32 6144, 6144
      %16 = vsyncadd [#allocation3], %s15
      %s17 = sshll.u32 [#allocation2], 4
      %s18 = int_to_ptr.vmem [resolvable:$true] %s17
      %23 = dma.hbm_to_vmem [thread:$0]  %s1, 6144, %s18, [#allocation3], 64, 64, 4
    $region9: #{fused_latent_mapping.1} parent=1 // pred_fallthru
      _
    // Predicated region
    $region10: #{fused_latent_mapping.1} parent=1 // pred_check
      _
    $region11: #{fused_latent_mapping.1} parent=1 // pred_check_branch
      %25 = sbr.rel (0) target = $region13
    $region12: #{fused_latent_mapping.1} parent=1 // pred_region
      _
    $region13: #{fused_latent_mapping.1} parent=1 // pred_fallthru
      _
    // Predicated region
    $region14: #{fused_latent_mapping.1} parent=1 // pred_check
      _
    $region15: #{fused_latent_mapping.1} parent=1 // pred_check_branch
      %27 = sbr.rel (0) target = $region17
    $region16: #{fused_latent_mapping.1} parent=1 // pred_region
      %28 = dma.done [#allocation3], 6144
    $region17: #{fused_latent_mapping.1} parent=1 // pred_fallthru
      _
    %v30 = vld [vmem:[%s0] sm:$0xff]
    %v31 = vpack.c.bf16 %v30, %v30
    %v32 = vld [vmem:[#allocation2] sm:$0xf]
    %v33 = vld [vmem:[#allocation2 + $0x4] sm:$0xf]
    %v34 = vld [vmem:[#allocation2 + $0x8] sm:$0xf]
    %v35 = vld [vmem:[#allocation2 + $0xc] sm:$0xf]
    %v36 = vld [vmem:[#allocation2 + $0x10] sm:$0xf]
    %v37 = vld [vmem:[#allocation2 + $0x14] sm:$0xf]
    %v38 = vld [vmem:[#allocation2 + $0x18] sm:$0xf]
    %v39 = vld [vmem:[#allocation2 + $0x1c] sm:$0xf]
    %v40 = vld [vmem:[#allocation2 + $0x20] sm:$0xf]
    %v41 = vld [vmem:[#allocation2 + $0x24] sm:$0xf]
    %v42 = vld [vmem:[#allocation2 + $0x28] sm:$0xf]
    %v43 = vld [vmem:[#allocation2 + $0x2c] sm:$0xf]
    %v44 = vld [vmem:[#allocation2 + $0x30] sm:$0xf]
    %v45 = vld [vmem:[#allocation2 + $0x34] sm:$0xf]
    %v46 = vld [vmem:[#allocation2 + $0x38] sm:$0xf]
    %v47 = vld [vmem:[#allocation2 + $0x3c] sm:$0xf]
    %v48 = vld [vmem:[%s2] sm:$0x1]
    %v50 = vlaneseq
    %v51 = vshrl.u32 %v50, 7
    %v52 = vsub.s32 0, %v51
    %v53 = vrot.slane %v48, %v52
    %v71 = vunpack.c.l.b16 %v32
    %v72 = vunpack.c.l.b16 %v33
    %v73 = vunpack.c.l.b16 %v34
    %v74 = vunpack.c.l.b16 %v35
    %v75 = vunpack.c.l.b16 %v36
    %v76 = vunpack.c.l.b16 %v37
    %v77 = vunpack.c.l.b16 %v38
    %v78 = vunpack.c.l.b16 %v39
    %v79 = vunpack.c.l.b16 %v40
    %v80 = vunpack.c.l.b16 %v41
    %v81 = vunpack.c.l.b16 %v42
    %v82 = vunpack.c.l.b16 %v43
    %v83 = vunpack.c.l.b16 %v44
    %v84 = vunpack.c.l.b16 %v45
    %v85 = vunpack.c.l.b16 %v46
    %v86 = vunpack.c.l.b16 %v47
    %v87 = vpack.c.b16 %v72, %v71
    %v88 = vpack.c.b16 %v74, %v73
    %v89 = vpack.c.b16 %v76, %v75
    %v90 = vpack.c.b16 %v78, %v77
    %v91 = vpack.c.b16 %v80, %v79
    %v92 = vpack.c.b16 %v82, %v81
    %v93 = vpack.c.b16 %v84, %v83
    %v94 = vpack.c.b16 %v86, %v85
    %103 = vmatprep.subr.bf16.mxu0 0
    %104 = vmatpush1.bf16.msra.mxu0 %v87
    %105 = vmatprep.subr.bf16.mxu0 0
    %106 = vmatpush1.bf16.msra.mxu0 %v88
    %107 = vmatprep.subr.bf16.mxu0 0
    %108 = vmatpush1.bf16.msra.mxu0 %v89
    %109 = vmatprep.subr.bf16.mxu0 0
    %110 = vmatpush1.bf16.msra.mxu0 %v90
    %111 = vmatprep.subr.bf16.mxu0 0
    %112 = vmatpush1.bf16.msra.mxu0 %v91
    %113 = vmatprep.subr.bf16.mxu0 0
    %114 = vmatpush1.bf16.msra.mxu0 %v92
    %115 = vmatprep.subr.bf16.mxu0 0
    %116 = vmatpush1.bf16.msra.mxu0 %v93
    %117 = vmatprep.subr.bf16.mxu0 0
    %118 = vmatpush1.bf16.msra.mxu0 %v94
    %119 = vmatprep.subr.bf16.mxu0 0
    %120 = vmatpush1.bf16.msra.mxu0 0
    %121 = vmatprep.subr.bf16.mxu0 0
    %122 = vmatpush1.bf16.msra.mxu0 0
    %123 = vmatprep.subr.bf16.mxu0 0
    %124 = vmatpush1.bf16.msra.mxu0 0
    %125 = vmatprep.subr.bf16.mxu0 0
    %126 = vmatpush1.bf16.msra.mxu0 0
    %127 = vmatprep.subr.bf16.mxu0 0
    %128 = vmatpush1.bf16.msra.mxu0 0
    %129 = vmatprep.subr.bf16.mxu0 0
    %130 = vmatpush1.bf16.msra.mxu0 0
    %131 = vmatprep.subr.bf16.mxu0 0
    %132 = vmatpush1.bf16.msra.mxu0 0
    %133 = vmatprep.subr.bf16.mxu0 0
    %134 = vmatpush1.bf16.msra.mxu0 0
    %135 = vmatprep.mubr.bf16.mxu0 0
    %136 = vmatmul.mubr.bf16.gmra.mrb[0].mxu0 %v31
    %v137 = vpop.f32.mrb[0].mxu0
    %v138 = vadd.f32 %v53, %v137
    %v139 = vpop.f32.mrb[0].mxu0
    %v140 = vpop.f32.mrb[0].mxu0
    %v141 = vpop.f32.mrb[0].mxu0
    %142 = vdwg.mxu0
    %v143 = vtanh.pop %v138
    %v144 = vpack.c.bf16 %v143, %v143
    %s145 = scalar_lea.vmem [#allocation2], 64
    %v146 = vld [vmem:[%s145] sm:$0xf]
    %v147 = vld [vmem:[%s145 + $0x4] sm:$0xf]
    %v148 = vld [vmem:[%s145 + $0x8] sm:$0xf]
    %v149 = vld [vmem:[%s145 + $0xc] sm:$0xf]
    %v150 = vld [vmem:[%s145 + $0x10] sm:$0xf]
    %v151 = vld [vmem:[%s145 + $0x14] sm:$0xf]
    %v152 = vld [vmem:[%s145 + $0x18] sm:$0xf]
    %v153 = vld [vmem:[%s145 + $0x1c] sm:$0xf]
    %v154 = vld [vmem:[%s145 + $0x20] sm:$0xf]
    %v155 = vld [vmem:[%s145 + $0x24] sm:$0xf]
    %v156 = vld [vmem:[%s145 + $0x28] sm:$0xf]
    %v157 = vld [vmem:[%s145 + $0x2c] sm:$0xf]
    %v158 = vld [vmem:[%s145 + $0x30] sm:$0xf]
    %v159 = vld [vmem:[%s145 + $0x34] sm:$0xf]
    %v160 = vld [vmem:[%s145 + $0x38] sm:$0xf]
    %v161 = vld [vmem:[%s145 + $0x3c] sm:$0xf]
    %s162 = scalar_lea.vmem %s2, 1
    %v163 = vld [vmem:[%s162] sm:$0x1]
    %v165 = vlaneseq
    %v166 = vshrl.u32 %v165, 7
    %v167 = vsub.s32 0, %v166
    %v168 = vrot.slane %v163, %v167
    %v186 = vunpack.c.l.b16 %v146
    %v187 = vunpack.c.l.b16 %v147
    %v188 = vunpack.c.l.b16 %v148
    %v189 = vunpack.c.l.b16 %v149
    %v190 = vunpack.c.l.b16 %v150
    %v191 = vunpack.c.l.b16 %v151
    %v192 = vunpack.c.l.b16 %v152
    %v193 = vunpack.c.l.b16 %v153
    %v194 = vunpack.c.l.b16 %v154
    %v195 = vunpack.c.l.b16 %v155
    %v196 = vunpack.c.l.b16 %v156
    %v197 = vunpack.c.l.b16 %v157
    %v198 = vunpack.c.l.b16 %v158
    %v199 = vunpack.c.l.b16 %v159
    %v200 = vunpack.c.l.b16 %v160
    %v201 = vunpack.c.l.b16 %v161
    %v202 = vpack.c.b16 %v187, %v186
    %v203 = vpack.c.b16 %v189, %v188
    %v204 = vpack.c.b16 %v191, %v190
    %v205 = vpack.c.b16 %v193, %v192
    %v206 = vpack.c.b16 %v195, %v194
    %v207 = vpack.c.b16 %v197, %v196
    %v208 = vpack.c.b16 %v199, %v198
    %v209 = vpack.c.b16 %v201, %v200
    %218 = vmatprep.subr.bf16.mxu0 0
    %219 = vmatpush1.bf16.msra.mxu0 %v202
    %220 = vmatprep.subr.bf16.mxu0 0
    %221 = vmatpush1.bf16.msra.mxu0 %v203
    %222 = vmatprep.subr.bf16.mxu0 0
    %223 = vmatpush1.bf16.msra.mxu0 %v204
    %224 = vmatprep.subr.bf16.mxu0 0
    %225 = vmatpush1.bf16.msra.mxu0 %v205
    %226 = vmatprep.subr.bf16.mxu0 0
    %227 = vmatpush1.bf16.msra.mxu0 %v206
    %228 = vmatprep.subr.bf16.mxu0 0
    %229 = vmatpush1.bf16.msra.mxu0 %v207
    %230 = vmatprep.subr.bf16.mxu0 0
    %231 = vmatpush1.bf16.msra.mxu0 %v208
    %232 = vmatprep.subr.bf16.mxu0 0
    %233 = vmatpush1.bf16.msra.mxu0 %v209
    %234 = vmatprep.subr.bf16.mxu0 0
    %235 = vmatpush1.bf16.msra.mxu0 0
    %236 = vmatprep.subr.bf16.mxu0 0
    %237 = vmatpush1.bf16.msra.mxu0 0
    %238 = vmatprep.subr.bf16.mxu0 0
    %239 = vmatpush1.bf16.msra.mxu0 0
    %240 = vmatprep.subr.bf16.mxu0 0
    %241 = vmatpush1.bf16.msra.mxu0 0
    %242 = vmatprep.subr.bf16.mxu0 0
    %243 = vmatpush1.bf16.msra.mxu0 0
    %244 = vmatprep.subr.bf16.mxu0 0
    %245 = vmatpush1.bf16.msra.mxu0 0
    %246 = vmatprep.subr.bf16.mxu0 0
    %247 = vmatpush1.bf16.msra.mxu0 0
    %248 = vmatprep.subr.bf16.mxu0 0
    %249 = vmatpush1.bf16.msra.mxu0 0
    %250 = vmatprep.mubr.bf16.mxu0 0
    %251 = vmatmul.mubr.bf16.gmra.mrb[0].mxu0 %v144
    %v252 = vpop.f32.mrb[0].mxu0
    %v253 = vadd.f32 %v168, %v252
    %v254 = vpop.f32.mrb[0].mxu0
    %v255 = vpop.f32.mrb[0].mxu0
    %v256 = vpop.f32.mrb[0].mxu0
    %257 = vdwg.mxu0
    %v258 = vtanh.pop %v253
    %v259 = vpack.c.bf16 %v258, %v258
    %s260 = scalar_lea.vmem [#allocation2], 128
    %v261 = vld [vmem:[%s260] sm:$0xf]
    %v262 = vld [vmem:[%s260 + $0x4] sm:$0xf]
    %v263 = vld [vmem:[%s260 + $0x8] sm:$0xf]
    %v264 = vld [vmem:[%s260 + $0xc] sm:$0xf]
    %v265 = vld [vmem:[%s260 + $0x10] sm:$0xf]
    %v266 = vld [vmem:[%s260 + $0x14] sm:$0xf]
    %v267 = vld [vmem:[%s260 + $0x18] sm:$0xf]
    %v268 = vld [vmem:[%s260 + $0x1c] sm:$0xf]
    %v269 = vld [vmem:[%s260 + $0x20] sm:$0xf]
    %v270 = vld [vmem:[%s260 + $0x24] sm:$0xf]
    %v271 = vld [vmem:[%s260 + $0x28] sm:$0xf]
    %v272 = vld [vmem:[%s260 + $0x2c] sm:$0xf]
    %v273 = vld [vmem:[%s260 + $0x30] sm:$0xf]
    %v274 = vld [vmem:[%s260 + $0x34] sm:$0xf]
    %v275 = vld [vmem:[%s260 + $0x38] sm:$0xf]
    %v276 = vld [vmem:[%s260 + $0x3c] sm:$0xf]
    %s277 = scalar_lea.vmem %s2, 2
    %v278 = vld [vmem:[%s277] sm:$0x1]
    %v280 = vlaneseq
    %v281 = vshrl.u32 %v280, 7
    %v282 = vsub.s32 0, %v281
    %v283 = vrot.slane %v278, %v282
    %v301 = vunpack.c.l.b16 %v261
    %v302 = vunpack.c.l.b16 %v262
    %v303 = vunpack.c.l.b16 %v263
    %v304 = vunpack.c.l.b16 %v264
    %v305 = vunpack.c.l.b16 %v265
    %v306 = vunpack.c.l.b16 %v266
    %v307 = vunpack.c.l.b16 %v267
    %v308 = vunpack.c.l.b16 %v268
    %v309 = vunpack.c.l.b16 %v269
    %v310 = vunpack.c.l.b16 %v270
    %v311 = vunpack.c.l.b16 %v271
    %v312 = vunpack.c.l.b16 %v272
    %v313 = vunpack.c.l.b16 %v273
    %v314 = vunpack.c.l.b16 %v274
    %v315 = vunpack.c.l.b16 %v275
    %v316 = vunpack.c.l.b16 %v276
    %v317 = vpack.c.b16 %v302, %v301
    %v318 = vpack.c.b16 %v304, %v303
    %v319 = vpack.c.b16 %v306, %v305
    %v320 = vpack.c.b16 %v308, %v307
    %v321 = vpack.c.b16 %v310, %v309
    %v322 = vpack.c.b16 %v312, %v311
    %v323 = vpack.c.b16 %v314, %v313
    %v324 = vpack.c.b16 %v316, %v315
    %333 = vmatprep.subr.bf16.mxu0 0
    %334 = vmatpush1.bf16.msra.mxu0 %v317
    %335 = vmatprep.subr.bf16.mxu0 0
    %336 = vmatpush1.bf16.msra.mxu0 %v318
    %337 = vmatprep.subr.bf16.mxu0 0
    %338 = vmatpush1.bf16.msra.mxu0 %v319
    %339 = vmatprep.subr.bf16.mxu0 0
    %340 = vmatpush1.bf16.msra.mxu0 %v320
    %341 = vmatprep.subr.bf16.mxu0 0
    %342 = vmatpush1.bf16.msra.mxu0 %v321
    %343 = vmatprep.subr.bf16.mxu0 0
    %344 = vmatpush1.bf16.msra.mxu0 %v322
    %345 = vmatprep.subr.bf16.mxu0 0
    %346 = vmatpush1.bf16.msra.mxu0 %v323
    %347 = vmatprep.subr.bf16.mxu0 0
    %348 = vmatpush1.bf16.msra.mxu0 %v324
    %349 = vmatprep.subr.bf16.mxu0 0
    %350 = vmatpush1.bf16.msra.mxu0 0
    %351 = vmatprep.subr.bf16.mxu0 0
    %352 = vmatpush1.bf16.msra.mxu0 0
    %353 = vmatprep.subr.bf16.mxu0 0
    %354 = vmatpush1.bf16.msra.mxu0 0
    %355 = vmatprep.subr.bf16.mxu0 0
    %356 = vmatpush1.bf16.msra.mxu0 0
    %357 = vmatprep.subr.bf16.mxu0 0
    %358 = vmatpush1.bf16.msra.mxu0 0
    %359 = vmatprep.subr.bf16.mxu0 0
    %360 = vmatpush1.bf16.msra.mxu0 0
    %361 = vmatprep.subr.bf16.mxu0 0
    %362 = vmatpush1.bf16.msra.mxu0 0
    %363 = vmatprep.subr.bf16.mxu0 0
    %364 = vmatpush1.bf16.msra.mxu0 0
    %365 = vmatprep.mubr.bf16.mxu0 0
    %366 = vmatmul.mubr.bf16.gmra.mrb[0].mxu0 %v259
    %v367 = vpop.f32.mrb[0].mxu0
    %v368 = vadd.f32 %v283, %v367
    %v369 = vpop.f32.mrb[0].mxu0
    %v370 = vpop.f32.mrb[0].mxu0
    %v371 = vpop.f32.mrb[0].mxu0
    %372 = vdwg.mxu0
    %v373 = vtanh.pop %v368
    %v374 = vpack.c.bf16 %v373, %v373
    %s375 = scalar_lea.vmem [#allocation2], 192
    %v376 = vld [vmem:[%s375] sm:$0xf]
    %v377 = vld [vmem:[%s375 + $0x4] sm:$0xf]
    %v378 = vld [vmem:[%s375 + $0x8] sm:$0xf]
    %v379 = vld [vmem:[%s375 + $0xc] sm:$0xf]
    %v380 = vld [vmem:[%s375 + $0x10] sm:$0xf]
    %v381 = vld [vmem:[%s375 + $0x14] sm:$0xf]
    %v382 = vld [vmem:[%s375 + $0x18] sm:$0xf]
    %v383 = vld [vmem:[%s375 + $0x1c] sm:$0xf]
    %v384 = vld [vmem:[%s375 + $0x20] sm:$0xf]
    %v385 = vld [vmem:[%s375 + $0x24] sm:$0xf]
    %v386 = vld [vmem:[%s375 + $0x28] sm:$0xf]
    %v387 = vld [vmem:[%s375 + $0x2c] sm:$0xf]
    %v388 = vld [vmem:[%s375 + $0x30] sm:$0xf]
    %v389 = vld [vmem:[%s375 + $0x34] sm:$0xf]
    %v390 = vld [vmem:[%s375 + $0x38] sm:$0xf]
    %v391 = vld [vmem:[%s375 + $0x3c] sm:$0xf]
    %s392 = scalar_lea.vmem %s2, 3
    %v393 = vld [vmem:[%s392] sm:$0x1]
    %v395 = vlaneseq
    %v396 = vshrl.u32 %v395, 7
    %v397 = vsub.s32 0, %v396
    %v398 = vrot.slane %v393, %v397
    %v416 = vunpack.c.l.b16 %v376
    %v417 = vunpack.c.l.b16 %v377
    %v418 = vunpack.c.l.b16 %v378
    %v419 = vunpack.c.l.b16 %v379
    %v420 = vunpack.c.l.b16 %v380
    %v421 = vunpack.c.l.b16 %v381
    %v422 = vunpack.c.l.b16 %v382
    %v423 = vunpack.c.l.b16 %v383
    %v424 = vunpack.c.l.b16 %v384
    %v425 = vunpack.c.l.b16 %v385
    %v426 = vunpack.c.l.b16 %v386
    %v427 = vunpack.c.l.b16 %v387
    %v428 = vunpack.c.l.b16 %v388
    %v429 = vunpack.c.l.b16 %v389
    %v430 = vunpack.c.l.b16 %v390
    %v431 = vunpack.c.l.b16 %v391
    %v432 = vpack.c.b16 %v417, %v416
    %v433 = vpack.c.b16 %v419, %v418
    %v434 = vpack.c.b16 %v421, %v420
    %v435 = vpack.c.b16 %v423, %v422
    %v436 = vpack.c.b16 %v425, %v424
    %v437 = vpack.c.b16 %v427, %v426
    %v438 = vpack.c.b16 %v429, %v428
    %v439 = vpack.c.b16 %v431, %v430
    %448 = vmatprep.subr.bf16.mxu0 0
    %449 = vmatpush1.bf16.msra.mxu0 %v432
    %450 = vmatprep.subr.bf16.mxu0 0
    %451 = vmatpush1.bf16.msra.mxu0 %v433
    %452 = vmatprep.subr.bf16.mxu0 0
    %453 = vmatpush1.bf16.msra.mxu0 %v434
    %454 = vmatprep.subr.bf16.mxu0 0
    %455 = vmatpush1.bf16.msra.mxu0 %v435
    %456 = vmatprep.subr.bf16.mxu0 0
    %457 = vmatpush1.bf16.msra.mxu0 %v436
    %458 = vmatprep.subr.bf16.mxu0 0
    %459 = vmatpush1.bf16.msra.mxu0 %v437
    %460 = vmatprep.subr.bf16.mxu0 0
    %461 = vmatpush1.bf16.msra.mxu0 %v438
    %462 = vmatprep.subr.bf16.mxu0 0
    %463 = vmatpush1.bf16.msra.mxu0 %v439
    %464 = vmatprep.subr.bf16.mxu0 0
    %465 = vmatpush1.bf16.msra.mxu0 0
    %466 = vmatprep.subr.bf16.mxu0 0
    %467 = vmatpush1.bf16.msra.mxu0 0
    %468 = vmatprep.subr.bf16.mxu0 0
    %469 = vmatpush1.bf16.msra.mxu0 0
    %470 = vmatprep.subr.bf16.mxu0 0
    %471 = vmatpush1.bf16.msra.mxu0 0
    %472 = vmatprep.subr.bf16.mxu0 0
    %473 = vmatpush1.bf16.msra.mxu0 0
    %474 = vmatprep.subr.bf16.mxu0 0
    %475 = vmatpush1.bf16.msra.mxu0 0
    %476 = vmatprep.subr.bf16.mxu0 0
    %477 = vmatpush1.bf16.msra.mxu0 0
    %478 = vmatprep.subr.bf16.mxu0 0
    %479 = vmatpush1.bf16.msra.mxu0 0
    %480 = vmatprep.mubr.bf16.mxu0 0
    %481 = vmatmul.mubr.bf16.gmra.mrb[0].mxu0 %v374
    %v482 = vpop.f32.mrb[0].mxu0
    %v483 = vadd.f32 %v398, %v482
    %v484 = vpop.f32.mrb[0].mxu0
    %v485 = vpop.f32.mrb[0].mxu0
    %v486 = vpop.f32.mrb[0].mxu0
    %487 = vdwg.mxu0
    %v488 = vtanh.pop %v483
    %v489 = vpack.c.bf16 %v488, %v488
    %s490 = scalar_lea.vmem [#allocation2], 256
    %v491 = vld [vmem:[%s490] sm:$0xf]
    %v492 = vld [vmem:[%s490 + $0x4] sm:$0xf]
    %v493 = vld [vmem:[%s490 + $0x8] sm:$0xf]
    %v494 = vld [vmem:[%s490 + $0xc] sm:$0xf]
    %v495 = vld [vmem:[%s490 + $0x10] sm:$0xf]
    %v496 = vld [vmem:[%s490 + $0x14] sm:$0xf]
    %v497 = vld [vmem:[%s490 + $0x18] sm:$0xf]
    %v498 = vld [vmem:[%s490 + $0x1c] sm:$0xf]
    %v499 = vld [vmem:[%s490 + $0x20] sm:$0xf]
    %v500 = vld [vmem:[%s490 + $0x24] sm:$0xf]
    %v501 = vld [vmem:[%s490 + $0x28] sm:$0xf]
    %v502 = vld [vmem:[%s490 + $0x2c] sm:$0xf]
    %v503 = vld [vmem:[%s490 + $0x30] sm:$0xf]
    %v504 = vld [vmem:[%s490 + $0x34] sm:$0xf]
    %v505 = vld [vmem:[%s490 + $0x38] sm:$0xf]
    %v506 = vld [vmem:[%s490 + $0x3c] sm:$0xf]
    %s507 = scalar_lea.vmem %s2, 4
    %v508 = vld [vmem:[%s507] sm:$0x1]
    %v510 = vlaneseq
    %v511 = vshrl.u32 %v510, 7
    %v512 = vsub.s32 0, %v511
    %v513 = vrot.slane %v508, %v512
    %v531 = vunpack.c.l.b16 %v491
    %v532 = vunpack.c.l.b16 %v492
    %v533 = vunpack.c.l.b16 %v493
    %v534 = vunpack.c.l.b16 %v494
    %v535 = vunpack.c.l.b16 %v495
    %v536 = vunpack.c.l.b16 %v496
    %v537 = vunpack.c.l.b16 %v497
    %v538 = vunpack.c.l.b16 %v498
    %v539 = vunpack.c.l.b16 %v499
    %v540 = vunpack.c.l.b16 %v500
    %v541 = vunpack.c.l.b16 %v501
    %v542 = vunpack.c.l.b16 %v502
    %v543 = vunpack.c.l.b16 %v503
    %v544 = vunpack.c.l.b16 %v504
    %v545 = vunpack.c.l.b16 %v505
    %v546 = vunpack.c.l.b16 %v506
    %v547 = vpack.c.b16 %v532, %v531
    %v548 = vpack.c.b16 %v534, %v533
    %v549 = vpack.c.b16 %v536, %v535
    %v550 = vpack.c.b16 %v538, %v537
    %v551 = vpack.c.b16 %v540, %v539
    %v552 = vpack.c.b16 %v542, %v541
    %v553 = vpack.c.b16 %v544, %v543
    %v554 = vpack.c.b16 %v546, %v545
    %563 = vmatprep.subr.bf16.mxu0 0
    %564 = vmatpush1.bf16.msra.mxu0 %v547
    %565 = vmatprep.subr.bf16.mxu0 0
    %566 = vmatpush1.bf16.msra.mxu0 %v548
    %567 = vmatprep.subr.bf16.mxu0 0
    %568 = vmatpush1.bf16.msra.mxu0 %v549
    %569 = vmatprep.subr.bf16.mxu0 0
    %570 = vmatpush1.bf16.msra.mxu0 %v550
    %571 = vmatprep.subr.bf16.mxu0 0
    %572 = vmatpush1.bf16.msra.mxu0 %v551
    %573 = vmatprep.subr.bf16.mxu0 0
    %574 = vmatpush1.bf16.msra.mxu0 %v552
    %575 = vmatprep.subr.bf16.mxu0 0
    %576 = vmatpush1.bf16.msra.mxu0 %v553
    %577 = vmatprep.subr.bf16.mxu0 0
    %578 = vmatpush1.bf16.msra.mxu0 %v554
    %579 = vmatprep.subr.bf16.mxu0 0
    %580 = vmatpush1.bf16.msra.mxu0 0
    %581 = vmatprep.subr.bf16.mxu0 0
    %582 = vmatpush1.bf16.msra.mxu0 0
    %583 = vmatprep.subr.bf16.mxu0 0
    %584 = vmatpush1.bf16.msra.mxu0 0
    %585 = vmatprep.subr.bf16.mxu0 0
    %586 = vmatpush1.bf16.msra.mxu0 0
    %587 = vmatprep.subr.bf16.mxu0 0
    %588 = vmatpush1.bf16.msra.mxu0 0
    %589 = vmatprep.subr.bf16.mxu0 0
    %590 = vmatpush1.bf16.msra.mxu0 0
    %591 = vmatprep.subr.bf16.mxu0 0
    %592 = vmatpush1.bf16.msra.mxu0 0
    %593 = vmatprep.subr.bf16.mxu0 0
    %594 = vmatpush1.bf16.msra.mxu0 0
    %595 = vmatprep.mubr.bf16.mxu0 0
    %596 = vmatmul.mubr.bf16.gmra.mrb[0].mxu0 %v489
    %v597 = vpop.f32.mrb[0].mxu0
    %v598 = vadd.f32 %v513, %v597
    %v599 = vpop.f32.mrb[0].mxu0
    %v600 = vpop.f32.mrb[0].mxu0
    %v601 = vpop.f32.mrb[0].mxu0
    %602 = vdwg.mxu0
    %v603 = vtanh.pop %v598
    %v604 = vpack.c.bf16 %v603, %v603
    %s605 = scalar_lea.vmem [#allocation2], 320
    %v606 = vld [vmem:[%s605] sm:$0xf]
    %v607 = vld [vmem:[%s605 + $0x4] sm:$0xf]
    %v608 = vld [vmem:[%s605 + $0x8] sm:$0xf]
    %v609 = vld [vmem:[%s605 + $0xc] sm:$0xf]
    %v610 = vld [vmem:[%s605 + $0x10] sm:$0xf]
    %v611 = vld [vmem:[%s605 + $0x14] sm:$0xf]
    %v612 = vld [vmem:[%s605 + $0x18] sm:$0xf]
    %v613 = vld [vmem:[%s605 + $0x1c] sm:$0xf]
    %v614 = vld [vmem:[%s605 + $0x20] sm:$0xf]
    %v615 = vld [vmem:[%s605 + $0x24] sm:$0xf]
    %v616 = vld [vmem:[%s605 + $0x28] sm:$0xf]
    %v617 = vld [vmem:[%s605 + $0x2c] sm:$0xf]
    %v618 = vld [vmem:[%s605 + $0x30] sm:$0xf]
    %v619 = vld [vmem:[%s605 + $0x34] sm:$0xf]
    %v620 = vld [vmem:[%s605 + $0x38] sm:$0xf]
    %v621 = vld [vmem:[%s605 + $0x3c] sm:$0xf]
    %s622 = scalar_lea.vmem %s2, 5
    %v623 = vld [vmem:[%s622] sm:$0x1]
    %v625 = vlaneseq
    %v626 = vshrl.u32 %v625, 7
    %v627 = vsub.s32 0, %v626
    %v628 = vrot.slane %v623, %v627
    %v646 = vunpack.c.l.b16 %v606
    %v647 = vunpack.c.l.b16 %v607
    %v648 = vunpack.c.l.b16 %v608
    %v649 = vunpack.c.l.b16 %v609
    %v650 = vunpack.c.l.b16 %v610
    %v651 = vunpack.c.l.b16 %v611
    %v652 = vunpack.c.l.b16 %v612
    %v653 = vunpack.c.l.b16 %v613
    %v654 = vunpack.c.l.b16 %v614
    %v655 = vunpack.c.l.b16 %v615
    %v656 = vunpack.c.l.b16 %v616
    %v657 = vunpack.c.l.b16 %v617
    %v658 = vunpack.c.l.b16 %v618
    %v659 = vunpack.c.l.b16 %v619
    %v660 = vunpack.c.l.b16 %v620
    %v661 = vunpack.c.l.b16 %v621
    %v662 = vpack.c.b16 %v647, %v646
    %v663 = vpack.c.b16 %v649, %v648
    %v664 = vpack.c.b16 %v651, %v650
    %v665 = vpack.c.b16 %v653, %v652
    %v666 = vpack.c.b16 %v655, %v654
    %v667 = vpack.c.b16 %v657, %v656
    %v668 = vpack.c.b16 %v659, %v658
    %v669 = vpack.c.b16 %v661, %v660
    %678 = vmatprep.subr.bf16.mxu0 0
    %679 = vmatpush1.bf16.msra.mxu0 %v662
    %680 = vmatprep.subr.bf16.mxu0 0
    %681 = vmatpush1.bf16.msra.mxu0 %v663
    %682 = vmatprep.subr.bf16.mxu0 0
    %683 = vmatpush1.bf16.msra.mxu0 %v664
    %684 = vmatprep.subr.bf16.mxu0 0
    %685 = vmatpush1.bf16.msra.mxu0 %v665
    %686 = vmatprep.subr.bf16.mxu0 0
    %687 = vmatpush1.bf16.msra.mxu0 %v666
    %688 = vmatprep.subr.bf16.mxu0 0
    %689 = vmatpush1.bf16.msra.mxu0 %v667
    %690 = vmatprep.subr.bf16.mxu0 0
    %691 = vmatpush1.bf16.msra.mxu0 %v668
    %692 = vmatprep.subr.bf16.mxu0 0
    %693 = vmatpush1.bf16.msra.mxu0 %v669
    %694 = vmatprep.subr.bf16.mxu0 0
    %695 = vmatpush1.bf16.msra.mxu0 0
    %696 = vmatprep.subr.bf16.mxu0 0
    %697 = vmatpush1.bf16.msra.mxu0 0
    %698 = vmatprep.subr.bf16.mxu0 0
    %699 = vmatpush1.bf16.msra.mxu0 0
    %700 = vmatprep.subr.bf16.mxu0 0
    %701 = vmatpush1.bf16.msra.mxu0 0
    %702 = vmatprep.subr.bf16.mxu0 0
    %703 = vmatpush1.bf16.msra.mxu0 0
    %704 = vmatprep.subr.bf16.mxu0 0
    %705 = vmatpush1.bf16.msra.mxu0 0
    %706 = vmatprep.subr.bf16.mxu0 0
    %707 = vmatpush1.bf16.msra.mxu0 0
    %708 = vmatprep.subr.bf16.mxu0 0
    %709 = vmatpush1.bf16.msra.mxu0 0
    %710 = vmatprep.mubr.bf16.mxu0 0
    %711 = vmatmul.mubr.bf16.gmra.mrb[0].mxu0 %v604
    %v712 = vpop.f32.mrb[0].mxu0
    %v713 = vadd.f32 %v628, %v712
    %v714 = vpop.f32.mrb[0].mxu0
    %v715 = vpop.f32.mrb[0].mxu0
    %v716 = vpop.f32.mrb[0].mxu0
    %717 = vdwg.mxu0
    %718 = vst [vmem:[#allocation5] sm:$0xff] %v713
    // Predicated region
    $region18: #{fused_latent_mapping.1} parent=1 // pred_check
      _
    $region19: #{fused_latent_mapping.1} parent=1 // pred_check_branch
      %720 = sbr.rel (0) target = $region21
    $region20: #{fused_latent_mapping.1} parent=1 // pred_region
      %s722 = ssub.s32 128, 128
      %723 = vsyncadd [#allocation4], %s722
      %s725 = sshll.u32 [#allocation5], 4
      %s726 = int_to_ptr.vmem [resolvable:$true] %s725
      %728 = dma.vmem_to_hbm [thread:$0]  %s726, 128, %s3, [#allocation4]
    $region21: #{fused_latent_mapping.1} parent=1 // pred_fallthru
      _
    // Predicated region
    $region22: #{fused_latent_mapping.1} parent=1 // pred_check
      _
    $region23: #{fused_latent_mapping.1} parent=1 // pred_check_branch
      %730 = sbr.rel (0) target = $region25
    $region24: #{fused_latent_mapping.1} parent=1 // pred_region
      %731 = dma.done [#allocation4], 128
    $region25: #{fused_latent_mapping.1} parent=1 // pred_fallthru
      _
    %732 = vsyncpa [#allocation3], 1
    %733 = vsyncpa [#allocation4], 1

</llo_original>
